<compile_context>
chip_gen: v5e
topology: v5e:2x2
jax: 0.10.0
libtpu: 0.0.40
codegen_flags: <defaults>
</compile_context>

<pallas_src>
import functools

import jax
import jax.numpy as jnp
from jax import lax
from jax.experimental import pallas as pl
from jax.experimental.pallas import tpu as pltpu


def _cdiv(a, b):
    return (a + b - 1) // b


def _round_up(a, b):
    return _cdiv(a, b) * b


def _pow_static(x, gamma: float):
    """(1-pt)**gamma; small integer gammas as repeated multiplies (no EUP pow)."""
    if gamma == 0.0:
        return jnp.ones_like(x)
    if float(gamma).is_integer() and 1.0 <= gamma <= 8.0:
        out = x
        for _ in range(int(gamma) - 1):
            out = out * x
        return out
    return x ** jnp.float32(gamma)


def _focal_loss_kernel(x_ref, t_ref, o_ref, *, gamma, valid_rows_last,
                       need_row_mask, hard_labels):
    s = pl.program_id(1)          # arbitrary (reduction) axis
    tile_rows, C = x_ref.shape

    @pl.when(s == 0)
    def _init():
        o_ref[...] = jnp.zeros_like(o_ref)

    x = x_ref[...].astype(jnp.float32)
    t = t_ref[...].astype(jnp.float32)

    if hard_labels:
        # Assumes t in {0, 1}: z = (2t-1)*x, bce = softplus(-z), pt = sigmoid(z).
        # Saves one full EUP transcendental per element (vrcp is cheap).
        z = (2.0 * t - 1.0) * x
        e = jnp.exp(-jnp.abs(z))
        bce = jnp.maximum(-z, 0.0) + jnp.log1p(e)
        pt = jnp.where(z >= 0.0, 1.0, e) * pl.reciprocal(1.0 + e, approx=True)
    else:
        # Numerically-stable BCE-with-logits (matches torch's implementation).
        bce = jnp.maximum(x, 0.0) - x * t + jnp.log1p(jnp.exp(-jnp.abs(x)))
        pt = jnp.exp(-bce)

    # alpha is hoisted to the wrapper (sum is linear in alpha).
    focal = _pow_static(1.0 - pt, gamma) * bce

    def _fold(v):
        # (tile_rows, C) -> (8, C) with pure VPU adds into the resident block.
        return jnp.sum(v.reshape(tile_rows // 8, 8, C), axis=0)

    if need_row_mask:
        # Only the globally-last block is partial: its out-of-bounds rows hold
        # garbage.  Mask (select, never multiply) only there; all other steps
        # pay zero mask cost.
        is_last = jnp.logical_and(pl.program_id(0) == pl.num_programs(0) - 1,
                                  s == pl.num_programs(1) - 1)

        @pl.when(is_last)
        def _masked():
            rid = lax.broadcasted_iota(jnp.int32, (tile_rows, C), 0)
            o_ref[...] += _fold(jnp.where(rid < valid_rows_last, focal, 0.0))

        @pl.when(jnp.logical_not(is_last))
        def _plain():
            o_ref[...] += _fold(focal)
    else:
        o_ref[...] += _fold(focal)


def focal_loss(logits, targets, alpha=0.25, gamma=2.0, hard_labels=False):
    """Mean focal loss over all elements. logits/targets: same shape, any rank.

    hard_labels=True enables a 2-transcendental pt=sigmoid(z) path that
    assumes targets are exactly 0/1 (uses an approximate reciprocal).
    """
    assert logits.shape == targets.shape
    total_n = int(logits.size)
    if total_n == 0:
        return jnp.float32(float("nan"))   # torch .mean() of an empty tensor

    C = 128                                # lane-dense last dim
    rows = _cdiv(total_n, C)
    rem = total_n % C

    flat_x = logits.reshape(-1)            # native dtype; no f32 pre-cast
    flat_t = targets.reshape(-1)
    if rem:
        # Rare ragged case: pad only up to the next 128-wide row.  Pad values
        # (x=-1e4, t=0) give bce == 0 and pt == 1 exactly, i.e. zero focal
        # contribution -> no element-level mask needed in the kernel.
        # TODO(synk): this still materialises one copy of the inputs; a
        # manual-DMA (pl.ANY) path could avoid it for non-multiple-of-128 sizes.
        pad = C - rem
        flat_x = jnp.pad(flat_x, (0, pad), constant_values=-1e4)
        flat_t = jnp.pad(flat_t, (0, pad), constant_values=0)
    x2d = flat_x.reshape(rows, C)          # free view when total_n % 128 == 0
    t2d = flat_t.reshape(rows, C)

    # Tile selection: big tiles for the HBM roofline (2 MiB per f32 input
    # block; 8 MiB double-buffered for 2 inputs), chosen BEFORE the core
    # split so 1-TC chips don't get halved tiles.
    CAP_ROWS = 4096
    tile_rows = min(CAP_ROWS, _round_up(rows, 8))
    n_tiles = _cdiv(rows, tile_rows)
    if n_tiles >= 2 and n_tiles % 2 == 1:
        # Make the tile count even so two TensorCores (v7x) get an exact,
        # balanced cover with no fully out-of-bounds blocks.
        tile_rows = min(CAP_ROWS, _round_up(_cdiv(rows, n_tiles + 1), 8))
        n_tiles = _cdiv(rows, tile_rows)
    if n_tiles >= 2 and n_tiles % 2 == 0:
        NP, steps = 2, n_tiles // 2        # shards across v7x cores; neutral on 1-TC chips
    else:
        NP, steps = 1, n_tiles

    valid_rows_last = rows - (n_tiles - 1) * tile_rows
    need_row_mask = valid_rows_last != tile_rows

    kernel = functools.partial(
        _focal_loss_kernel,
        gamma=float(gamma),
        valid_rows_last=int(valid_rows_last),
        need_row_mask=bool(need_row_mask),
        hard_labels=bool(hard_labels),
    )

    partials = pl.pallas_call(
        kernel,
        out_shape=jax.ShapeDtypeStruct((NP * 8, C), jnp.float32),
        grid_spec=pltpu.PrefetchScalarGridSpec(
            num_scalar_prefetch=0,
            grid=(NP, steps),
            in_specs=[
                pl.BlockSpec((tile_rows, C), lambda p, s: (p * steps + s, 0)),
                pl.BlockSpec((tile_rows, C), lambda p, s: (p * steps + s, 0)),
            ],
            out_specs=pl.BlockSpec((8, C), lambda p, s: (p, 0)),
        ),
        compiler_params=pltpu.CompilerParams(
            dimension_semantics=("parallel", "arbitrary"),
            vmem_limit_bytes=32 * 1024 * 1024,
        ),
    )(x2d, t2d)

    # alpha hoisted out of the kernel; final cross-lane reduce of the tiny
    # (NP*8, 128) partial slab happens here.
    return jnp.float32(alpha) * jnp.sum(partials) / jnp.float32(total_n)


def focal_loss_ref(logits, targets, alpha=0.25, gamma=2.0):
    x = logits.astype(jnp.float32)
    t = targets.astype(jnp.float32)
    bce = jnp.maximum(x, 0.0) - x * t + jnp.log1p(jnp.exp(-jnp.abs(x)))
    pt = jnp.exp(-bce)
    return jnp.mean(alpha * (1.0 - pt) ** gamma * bce)


if __name__ == "__main__":
    key = jax.random.PRNGKey(0)
    k1, k2, k3, k4, k5, k6 = jax.random.split(key, 6)

    # Small (N, *) logits; 2048 elements -> copy-free [16, 128] slab, no mask.
    shape = (2, 4, 16, 16)
    logits = jax.random.normal(k1, shape, dtype=jnp.float32)
    targets = jax.random.bernoulli(k2, 0.3, shape).astype(jnp.float32)
    loss = jax.block_until_ready(focal_loss(logits, targets, alpha=0.25, gamma=2.0))
    ref = focal_loss_ref(logits, targets, alpha=0.25, gamma=2.0)
    assert jnp.allclose(loss, ref, rtol=1e-5, atol=1e-6), (loss, ref)

    # Ragged size: exercises the tiny tail pad + partial final block row mask.
    shape2 = (10, 7)
    logits2 = jax.random.normal(k3, shape2, dtype=jnp.float32)
    targets2 = jax.random.bernoulli(k4, 0.5, shape2).astype(jnp.float32)
    loss2 = jax.block_until_ready(focal_loss(logits2, targets2))
    ref2 = focal_loss_ref(logits2, targets2)
    assert jnp.allclose(loss2, ref2, rtol=1e-5, atol=1e-6), (loss2, ref2)

    # bf16 inputs + hard-label (2-transcendental) fast path.
    shape3 = (4, 8, 32)   # 1024 elements -> [8, 128]
    logits3 = jax.random.normal(k5, shape3, dtype=jnp.bfloat16)
    targets3 = jax.random.bernoulli(k6, 0.4, shape3).astype(jnp.bfloat16)
    loss3 = jax.block_until_ready(focal_loss(logits3, targets3, hard_labels=True))
    ref3 = focal_loss_ref(logits3, targets3)
    assert jnp.allclose(loss3, ref3, rtol=5e-3, atol=1e-5), (loss3, ref3)

    print("KERNEL_OK")
</pallas_src>

<mosaic_0001>
module attributes {stable_mosaic.version = 11 : i64} {
  func.func @_focal_loss_kernel(%arg0: i32, %arg1: i32, %arg2: memref<16x128xf32, #tpu.memory_space<vmem>>, %arg3: memref<16x128xf32, #tpu.memory_space<vmem>>, %arg4: memref<8x128xf32, #tpu.memory_space<vmem>>) attributes {dimension_semantics = [#tpu.dimension_semantics<parallel>, #tpu.dimension_semantics<arbitrary>], iteration_bounds = array<i64: 1, 1>, scalar_prefetch = 0 : i64, scratch_operands = 0 : i64, tpu.core_type = #tpu.core_type<tc>, window_params = [{transform_indices = @transform_0, window_bounds = array<i64: 16, 128>}, {transform_indices = @transform_1, window_bounds = array<i64: 16, 128>}, {transform_indices = @transform_2, window_bounds = array<i64: 8, 128>}]} {
    %c0_i32 = arith.constant 0 : i32
    %0 = arith.cmpi eq, %arg1, %c0_i32 : i32
    %1 = arith.extui %0 : i1 to i32
    %c0_i32_0 = arith.constant 0 : i32
    %2 = arith.cmpi ne, %1, %c0_i32_0 : i32
    scf.if %2 {
      %cst_12 = arith.constant 0.000000e+00 : f32
      %27 = vector.broadcast %cst_12 : f32 to vector<8x128xf32>
      %c0_13 = arith.constant 0 : index
      %c0_14 = arith.constant 0 : index
      %28 = vector.load %arg4[%c0_13, %c0_14] : memref<8x128xf32, #tpu.memory_space<vmem>>, vector<8x128xf32>
      tpu.vector_store %arg4[%c0_13, %c0_14], %27 {strides = array<i32>} : memref<8x128xf32, #tpu.memory_space<vmem>>, vector<8x128xf32>,
    } else {
    }
    %c0 = arith.constant 0 : index
    %c0_1 = arith.constant 0 : index
    %3 = vector.load %arg2[%c0, %c0_1] : memref<16x128xf32, #tpu.memory_space<vmem>>, vector<16x128xf32>
    %c0_2 = arith.constant 0 : index
    %c0_3 = arith.constant 0 : index
    %4 = vector.load %arg3[%c0_2, %c0_3] : memref<16x128xf32, #tpu.memory_space<vmem>>, vector<16x128xf32>
    %cst = arith.constant 0.000000e+00 : f32
    %5 = vector.broadcast %cst : f32 to vector<16x128xf32>
    %6 = arith.maximumf %3, %5 : vector<16x128xf32>
    %7 = arith.mulf %3, %4 : vector<16x128xf32>
    %8 = arith.subf %6, %7 : vector<16x128xf32>
    %9 = math.absf %3 : vector<16x128xf32>
    %cst_4 = arith.constant 0.000000e+00 : f32
    %10 = vector.broadcast %cst_4 : f32 to vector<16x128xf32>
    %11 = arith.subf %10, %9 : vector<16x128xf32>
    %12 = math.exp %11 : vector<16x128xf32>
    %13 = math.log1p %12 : vector<16x128xf32>
    %14 = arith.addf %8, %13 : vector<16x128xf32>
    %cst_5 = arith.constant 0.000000e+00 : f32
    %15 = vector.broadcast %cst_5 : f32 to vector<16x128xf32>
    %16 = arith.subf %15, %14 : vector<16x128xf32>
    %17 = math.exp %16 : vector<16x128xf32>
    %cst_6 = arith.constant 1.000000e+00 : f32
    %18 = vector.broadcast %cst_6 : f32 to vector<16x128xf32>
    %19 = arith.subf %18, %17 : vector<16x128xf32>
    %20 = arith.mulf %19, %19 : vector<16x128xf32>
    %21 = arith.mulf %20, %14 : vector<16x128xf32>
    %c0_7 = arith.constant 0 : index
    %c0_8 = arith.constant 0 : index
    %22 = vector.load %arg4[%c0_7, %c0_8] : memref<8x128xf32, #tpu.memory_space<vmem>>, vector<8x128xf32>
    %23 = vector.shape_cast %21 : vector<16x128xf32> to vector<2x8x128xf32>
    %cst_9 = arith.constant dense<0.000000e+00> : vector<8x128xf32>
    %24 = vector.multi_reduction <add>, %23, %cst_9 [0] : vector<2x8x128xf32> to vector<8x128xf32>
    %25 = arith.addf %22, %24 : vector<8x128xf32>
    %c0_10 = arith.constant 0 : index
    %c0_11 = arith.constant 0 : index
    %26 = vector.load %arg4[%c0_10, %c0_11] : memref<8x128xf32, #tpu.memory_space<vmem>>, vector<8x128xf32>
    tpu.vector_store %arg4[%c0_10, %c0_11], %25 {strides = array<i32>} : memref<8x128xf32, #tpu.memory_space<vmem>>, vector<8x128xf32>,
    return
  }
  func.func @transform_0(%arg0: i32, %arg1: i32) -> (i32, i32) {
    %c1_i32 = arith.constant 1 : i32
    %0 = arith.muli %arg0, %c1_i32 : i32
    %1 = arith.addi %0, %arg1 : i32
    %c0_i32 = arith.constant 0 : i32
    %c0_i32_0 = arith.constant 0 : i32
    return %1, %c0_i32 : i32, i32
  }
  func.func @transform_1(%arg0: i32, %arg1: i32) -> (i32, i32) {
    %c1_i32 = arith.constant 1 : i32
    %0 = arith.muli %arg0, %c1_i32 : i32
    %1 = arith.addi %0, %arg1 : i32
    %c0_i32 = arith.constant 0 : i32
    %c0_i32_0 = arith.constant 0 : i32
    return %1, %c0_i32 : i32, i32
  }
  func.func @transform_2(%arg0: i32, %arg1: i32) -> (i32, i32) {
    %c0_i32 = arith.constant 0 : i32
    %c0_i32_0 = arith.constant 0 : i32
    return %arg0, %c0_i32 : i32, i32
  }
}

</mosaic_0001>

<llo_original>
// kernel: tpu_custom_call.1
$region0: #{tpu_custom_call.1}
  #allocation0 [shape = 'u32[]', space=smem, size = 0x4, offset = 0x4, fixed_abs, tag = 'smem constant byte address 0x4 - core index']
  #allocation1 [shape = 'u32[72,128]{1,0:T(1,128)}', space=vmem, size = 0x9000, scoped, tag = 'internal scratch']
  %s0 = inlined_call_operand.hbm [shape: f32[16,128], index: 0, kind: input, shape index: {}]
  %s1 = inlined_call_operand.hbm [shape: f32[16,128], index: 1, kind: input, shape index: {}]
  %s2 = inlined_call_operand.hbm [shape: f32[8,128], index: 2, kind: output, shape index: {}]
  %s3 = sld [smem:[#allocation0]]
  $region30: #{tpu_custom_call.1} parent=0
    _
  %s5 = ssub.s32 1, %s3
  %s6 = scalar_select 0, %s5, %s3
  $region1: #{tpu_custom_call.1} parent=0
    #allocation2 [shape = 'u8[8192]{0}', space=vmem, size = 0x2000, scoped, tag = 'input window, operand 0, single buffered']
    #allocation3 [shape = 's32[1]{0}', space=sflag, size = 0x4, scoped, tag = 'scoped memory for tpu_custom_call.1']
    #allocation4 [shape = 's32[1]{0}', space=sflag, size = 0x4, scoped, tag = 'scoped memory for tpu_custom_call.1']
    #allocation5 [shape = 'u8[8192]{0}', space=vmem, size = 0x2000, scoped, tag = 'input window, operand 1, single buffered']
    #allocation6 [shape = 's32[1]{0}', space=sflag, size = 0x4, scoped, tag = 'scoped memory for tpu_custom_call.1']
    #allocation7 [shape = 'u8[4096]{0}', space=vmem, size = 0x1000, scoped, tag = 'output window, operand 0, single buffered']
    %7 = vsyncpa [#allocation3], 0
    %8 = vsyncpa [#allocation6], 0
    %9 = vsyncpa [#allocation4], 0
    // Predicated region
    $region2: #{tpu_custom_call.1} parent=1 // pred_check
      _
    $region3: #{tpu_custom_call.1} parent=1 // pred_check_branch
      %11 = sbr.rel (0) target = $region5
    $region4: #{tpu_custom_call.1} parent=1 // pred_region
      %s12 = sadd.s32 0, 0
      %s13 = smul.u32 2, %s12
      %15 = vsyncadd [#allocation3], 0
      %s16 = smul.addr %s13, 8
      %s17 = scalar_lea.hbm %s0, %s16
      %s18 = sshll.u32 %s17, 4
      %s19 = int_to_ptr.hbm [resolvable:$true] %s18
      %s20 = sshll.u32 [#allocation2], 4
      %s21 = int_to_ptr.vmem [resolvable:$true] %s20
      %26 = dma.hbm_to_vmem [thread:$0]  %s19, 256, %s21, [#allocation3], 128, 128, 8
    $region5: #{tpu_custom_call.1} parent=1 // pred_fallthru
      _
    // Predicated region
    $region6: #{tpu_custom_call.1} parent=1 // pred_check
      _
    $region7: #{tpu_custom_call.1} parent=1 // pred_check_branch
      %28 = sbr.rel (0) target = $region9
    $region8: #{tpu_custom_call.1} parent=1 // pred_region
      %s29 = sadd.s32 0, 0
      %s30 = smul.u32 2, %s29
      %32 = vsyncadd [#allocation6], 0
      %s33 = smul.addr %s30, 8
      %s34 = scalar_lea.hbm %s1, %s33
      %s35 = sshll.u32 %s34, 4
      %s36 = int_to_ptr.hbm [resolvable:$true] %s35
      %s37 = sshll.u32 [#allocation5], 4
      %s38 = int_to_ptr.vmem [resolvable:$true] %s37
      %43 = dma.hbm_to_vmem [thread:$0]  %s36, 256, %s38, [#allocation6], 128, 128, 8
    $region9: #{tpu_custom_call.1} parent=1 // pred_fallthru
      _
    // Predicated region
    $region10: #{tpu_custom_call.1} parent=1 // pred_check
      _
    $region11: #{tpu_custom_call.1} parent=1 // pred_check_branch
      %45 = sbr.rel (0) target = $region13
    $region12: #{tpu_custom_call.1} parent=1 // pred_region
      %47 = dma.done [#allocation3], 256
    $region13: #{tpu_custom_call.1} parent=1 // pred_fallthru
      _
    // Predicated region
    $region14: #{tpu_custom_call.1} parent=1 // pred_check
      _
    $region15: #{tpu_custom_call.1} parent=1 // pred_check_branch
      %49 = sbr.rel (0) target = $region17
    $region16: #{tpu_custom_call.1} parent=1 // pred_region
      %51 = dma.done [#allocation6], 256
    $region17: #{tpu_custom_call.1} parent=1 // pred_fallthru
      _
    %s52 = sadd.s32 0, 0
    %s53 = smul.u32 2, %s52
    %s54 = sadd.s32 0, 0
    %s55 = smul.u32 2, %s54
    %p56 = scmp.eq.s32.totalorder 0, 0
    // Predicated region
    $region18: #{tpu_custom_call.1} parent=1 // pred_check
      %p57 = pneg %p56
    $region19: #{tpu_custom_call.1} parent=1 // pred_check_branch
      %59 = sbr.rel (%p57) target = $region21
    $region20: #{tpu_custom_call.1} parent=1 // pred_region
      %60 = vst [vmem:[#allocation7] sm:$0xff] 0.0
    $region21: #{tpu_custom_call.1} parent=1 // pred_fallthru
      _
    %v61 = vld [vmem:[#allocation2] sm:$0xff]
    %v62 = vld [vmem:[#allocation2 + $0x8] sm:$0xff]
    %v63 = vld [vmem:[#allocation5] sm:$0xff]
    %v64 = vld [vmem:[#allocation5 + $0x8] sm:$0xff]
    %v65 = vmax.f32 %v61, 0.0
    %v66 = vmax.f32 %v62, 0.0
    %v67 = vmul.f32 %v61, %v63
    %v68 = vmul.f32 %v62, %v64
    %v69 = vsub.f32 %v65, %v67
    %v70 = vsub.f32 %v66, %v68
    %v71 = vand.u32 2147483647, %v61
    %v72 = vand.u32 2147483647, %v62
    %v73 = vsub.f32 0.0, %v71
    %v74 = vsub.f32 0.0, %v72
    %v75 = vmul.f32 %v73, 1.442695
    %v76 = vpow.pop %v75
    %v77 = vmul.f32 %v74, 1.442695
    %v78 = vpow.pop %v77
    %v79 = vadd.f32 %v76, 1.0
    %v80 = vlog2.pop %v79
    %v81 = vmul.f32 %v80, 0.6931472
    %v82 = vmul.f32 -0.5, %v76
    %v83 = vadd.f32 %v82, 1.0
    %v84 = vmul.f32 %v83, %v76
    %v85 = vand.u32 2147483647, %v76
    %vm86 = vcmp.lt.f32.partialorder %v85, 0.0004427343
    %v87 = vsel %vm86, %v84, %v81
    %v88 = vadd.f32 %v78, 1.0
    %v89 = vlog2.pop %v88
    %v90 = vmul.f32 %v89, 0.6931472
    %v91 = vmul.f32 -0.5, %v78
    %v92 = vadd.f32 %v91, 1.0
    %v93 = vmul.f32 %v92, %v78
    %v94 = vand.u32 2147483647, %v78
    %vm95 = vcmp.lt.f32.partialorder %v94, 0.0004427343
    %v96 = vsel %vm95, %v93, %v90
    %v97 = vadd.f32 %v69, %v87
    %v98 = vadd.f32 %v70, %v96
    %v99 = vsub.f32 0.0, %v97
    %v100 = vsub.f32 0.0, %v98
    %v101 = vmul.f32 %v99, 1.442695
    %v102 = vpow.pop %v101
    %v103 = vmul.f32 %v100, 1.442695
    %v104 = vpow.pop %v103
    %v105 = vsub.f32 1.0, %v102
    %v106 = vsub.f32 1.0, %v104
    %v107 = vmul.f32 %v105, %v105
    %v108 = vmul.f32 %v106, %v106
    %v109 = vmul.f32 %v107, %v97
    %v110 = vmul.f32 %v108, %v98
    %v111 = vld [vmem:[#allocation7] sm:$0xff]
    %v112 = vadd.f32 %v109, %v110
    %v113 = vadd.f32 %v111, %v112
    %114 = vst [vmem:[#allocation7] sm:$0xff] %v113
    // Predicated region
    $region22: #{tpu_custom_call.1} parent=1 // pred_check
      _
    $region23: #{tpu_custom_call.1} parent=1 // pred_check_branch
      %116 = sbr.rel (0) target = $region25
    $region24: #{tpu_custom_call.1} parent=1 // pred_region
      %118 = vsyncadd [#allocation4], 0
      %s120 = sshll.u32 [#allocation7], 4
      %s121 = int_to_ptr.vmem [resolvable:$true] %s120
      %s122 = sshll.u32 %s2, 4
      %s123 = int_to_ptr.hbm [resolvable:$true] %s122
      %125 = dma.vmem_to_hbm [thread:$0]  %s121, 128, %s123, [#allocation4]
    $region25: #{tpu_custom_call.1} parent=1 // pred_fallthru
      _
    // Predicated region
    $region26: #{tpu_custom_call.1} parent=1 // pred_check
      _
    $region27: #{tpu_custom_call.1} parent=1 // pred_check_branch
      %127 = sbr.rel (0) target = $region29
    $region28: #{tpu_custom_call.1} parent=1 // pred_region
      %129 = dma.done [#allocation4], 128
    $region29: #{tpu_custom_call.1} parent=1 // pred_fallthru
      _
    %130 = vsyncpa [#allocation3], 1
    %131 = vsyncpa [#allocation6], 1
    %132 = vsyncpa [#allocation4], 1

</llo_original>
